<compile_context>
chip_gen: v5e
topology: v5e:2x2
jax: 0.10.0
libtpu: 0.0.40
codegen_flags: <defaults>
</compile_context>

<pallas_src>
import jax
import jax.numpy as jnp
from jax.experimental import pallas as pl
from jax.experimental.pallas import tpu as pltpu

_LANE = 128            # output columns padded to a multiple of the lane width
_SUBLANE = 8           # f32 sublane height: batch tile is a multiple of this
_MAX_TILE_M = 1024     # x tile (tile_m * D_in * 4B, double-buffered) stays ~8 MiB
_MIN_TILE_M = 256      # measured: 256-row tiles already ~63% of HBM roofline
_TARGET_GRID_STEPS = 4 # keep >= 2-4 grid steps so pipelining / 2-TC split engage


def _round_up(n, m):
    return ((n + m - 1) // m) * m


def _ceil_div(a, b):
    return -(-a // b)


def _linear_kernel(x_ref, wt_ref, b_ref, o_ref):
    # Hot path: MXU matmul with f32 accumulation + bias add, all in VMEM.
    acc = jnp.dot(x_ref[...], wt_ref[...], preferred_element_type=jnp.float32)
    o_ref[...] = (acc + b_ref[...]).astype(o_ref.dtype)


def prepare_params(weight, bias, *, param_dtype=jnp.float32):
    """One-time parameter prep (do NOT call per forward).

    weight: (D_out, D_in) float32 (PyTorch nn.Linear layout)
    bias:   (D_out,)      float32
    param_dtype: storage dtype for the weight (jnp.bfloat16 halves HBM traffic
                 if precision allows; default float32 matches nn.Linear).
    returns (wt_padded (D_in, D_out_p), bias_padded (1, D_out_p) f32, d_out)
    with D_out_p = next multiple of 128; padded columns are zero-filled.
    """
    d_out, d_in = weight.shape
    d_out_p = _round_up(d_out, _LANE)
    wt = jnp.zeros((d_in, d_out_p), param_dtype)
    wt = wt.at[:, :d_out].set(weight.T.astype(param_dtype))
    b2d = jnp.zeros((1, d_out_p), jnp.float32)          # bias added post-acc in f32
    b2d = b2d.at[:, :d_out].set(bias.astype(jnp.float32))
    return wt, b2d, d_out


def softmax_model_forward(x, wt_padded, bias_padded, d_out, *, max_tile_m=_MAX_TILE_M):
    """Pallas implementation of SoftmaxModel.forward.

    x:           (B, ...) with prod(trailing dims) == D_in
    wt_padded:   (D_in, D_out_p) from prepare_params
    bias_padded: (1, D_out_p) float32 from prepare_params
    d_out:       true (unpadded) number of output classes
    returns      (B, d_out) float32
    """
    B = x.shape[0]
    d_in, d_out_p = wt_padded.shape
    # x follows the weight's storage dtype (f32 by default, bf16 if requested);
    # no batch padding copy is made -- the grid handles the ragged last block.
    x2d = x.reshape(B, d_in).astype(wt_padded.dtype)

    # Batch tile: aim for >= _TARGET_GRID_STEPS grid steps, floor 256 rows,
    # cap at max_tile_m, never larger than the (sublane-rounded) batch itself.
    tile_m = _round_up(max(_ceil_div(B, _TARGET_GRID_STEPS), _MIN_TILE_M), _SUBLANE)
    tile_m = min(tile_m, max_tile_m, _round_up(B, _SUBLANE))
    grid_m = _ceil_div(B, tile_m)

    itemsize = jnp.dtype(x2d.dtype).itemsize
    flops = 2 * B * d_in * d_out_p
    bytes_accessed = (itemsize * (B * d_in + d_in * d_out_p)
                      + 4 * (d_out_p + B * d_out_p))

    out = pl.pallas_call(
        _linear_kernel,
        out_shape=jax.ShapeDtypeStruct((B, d_out_p), jnp.float32),
        grid=(grid_m,),
        in_specs=[
            # x tile: pipelined (double-buffered) along the batch grid axis.
            pl.BlockSpec((tile_m, d_in), lambda i: (i, 0)),
            # Weight / bias: constant index_map -> fetched once; single-buffer
            # to free VMEM (matters on v7x's 64 MiB VMEM).
            pl.BlockSpec((d_in, d_out_p), lambda i: (0, 0),
                         pipeline_mode=pl.Buffered(1)),
            pl.BlockSpec((1, d_out_p), lambda i: (0, 0),
                         pipeline_mode=pl.Buffered(1)),
        ],
        out_specs=pl.BlockSpec((tile_m, d_out_p), lambda i: (i, 0)),
        compiler_params=pltpu.CompilerParams(
            dimension_semantics=("parallel",),   # batch axis -> 2 TCs on v7x when grid >= 2
            vmem_limit_bytes=32 * 1024 * 1024,   # safe headroom for tile_m=1024 on all gens
        ),
        cost_estimate=pl.CostEstimate(
            flops=flops, transcendentals=0, bytes_accessed=bytes_accessed),
    )(x2d, wt_padded, bias_padded)

    # Strip the zero-padded logit columns; never let them reach a softmax.
    return out[:, :d_out]


if __name__ == "__main__":
    # Small shapes consistent with the module: B=2, input image (4, 16, 16)
    # -> D_in = 1024, D_out = 10 classes.
    B, C, H, W = 2, 4, 16, 16
    D_in = C * H * W
    D_out = 10

    key = jax.random.PRNGKey(0)
    kx, kw, kb = jax.random.split(key, 3)

    x = jax.random.normal(kx, (B, C, H, W), dtype=jnp.float32)

    # Deterministic parameter init mimicking nn.Linear's default:
    # U(-1/sqrt(D_in), 1/sqrt(D_in)) for both weight and bias.
    bound = 1.0 / jnp.sqrt(jnp.float32(D_in))
    weight = jax.random.uniform(kw, (D_out, D_in), jnp.float32, -bound, bound)
    bias = jax.random.uniform(kb, (D_out,), jnp.float32, -bound, bound)

    # One-time parameter prep (transpose + lane padding) outside the hot path.
    # float32 keeps exact nn.Linear semantics; pass param_dtype=jnp.bfloat16 to
    # halve HBM traffic when precision allows.
    wt_p, b_p, d_out = prepare_params(weight, bias)

    out = softmax_model_forward(x, wt_p, b_p, d_out)
    out = jax.block_until_ready(out)

    # Pure-JAX reference for correctness.
    ref = x.reshape(B, D_in) @ weight.T + bias
    assert out.shape == (B, D_out), out.shape
    assert jnp.allclose(out, ref, atol=1e-5, rtol=1e-5), "mismatch vs reference"

    print("KERNEL_OK")
</pallas_src>

<mosaic_0001>
module attributes {stable_mosaic.version = 11 : i64} {
  func.func @_linear_kernel(%arg0: i32, %arg1: memref<8x1024xf32, #tpu.memory_space<vmem>>, %arg2: memref<1024x128xf32, #tpu.memory_space<vmem>>, %arg3: memref<1x128xf32, #tpu.memory_space<vmem>>, %arg4: memref<8x128xf32, #tpu.memory_space<vmem>>) attributes {dimension_semantics = [#tpu.dimension_semantics<parallel>], iteration_bounds = array<i64: 1>, scalar_prefetch = 0 : i64, scratch_operands = 0 : i64, tpu.core_type = #tpu.core_type<tc>, window_params = [{transform_indices = @transform_0, window_bounds = array<i64: 8, 1024>}, {pipeline_mode = #tpu.pipeline_mode<synchronous>, transform_indices = @transform_1, window_bounds = array<i64: 1024, 128>}, {pipeline_mode = #tpu.pipeline_mode<synchronous>, transform_indices = @transform_2, window_bounds = array<i64: 1, 128>}, {transform_indices = @transform_3, window_bounds = array<i64: 8, 128>}]} {
    %c0 = arith.constant 0 : index
    %c0_0 = arith.constant 0 : index
    %0 = vector.load %arg1[%c0, %c0_0] : memref<8x1024xf32, #tpu.memory_space<vmem>>, vector<8x1024xf32>
    %c0_1 = arith.constant 0 : index
    %c0_2 = arith.constant 0 : index
    %1 = vector.load %arg2[%c0_1, %c0_2] : memref<1024x128xf32, #tpu.memory_space<vmem>>, vector<1024x128xf32>
    %cst = arith.constant dense<0.000000e+00> : vector<8x128xf32>
    %2 = tpu.matmul %0, %1, %cst {dimension_numbers = #tpu.dot_dimension_numbers<[1], [0], [0], [1], [0, 0, 1, 1], [], []>} : vector<8x1024xf32>, vector<1024x128xf32>, vector<8x128xf32> -> vector<8x128xf32>
    %c0_3 = arith.constant 0 : index
    %c0_4 = arith.constant 0 : index
    %3 = vector.load %arg3[%c0_3, %c0_4] : memref<1x128xf32, #tpu.memory_space<vmem>>, vector<1x128xf32>
    %4 = vector.broadcast %3 : vector<1x128xf32> to vector<8x128xf32>
    %5 = arith.addf %2, %4 : vector<8x128xf32>
    %c0_5 = arith.constant 0 : index
    %c0_6 = arith.constant 0 : index
    %6 = vector.load %arg4[%c0_5, %c0_6] : memref<8x128xf32, #tpu.memory_space<vmem>>, vector<8x128xf32>
    tpu.vector_store %arg4[%c0_5, %c0_6], %5 {strides = array<i32>} : memref<8x128xf32, #tpu.memory_space<vmem>>, vector<8x128xf32>,
    return
  }
  func.func @transform_0(%arg0: i32) -> (i32, i32) {
    %c0_i32 = arith.constant 0 : i32
    %c0_i32_0 = arith.constant 0 : i32
    return %arg0, %c0_i32 : i32, i32
  }
  func.func @transform_1(%arg0: i32) -> (i32, i32) {
    %c0_i32 = arith.constant 0 : i32
    %c0_i32_0 = arith.constant 0 : i32
    %c0_i32_1 = arith.constant 0 : i32
    return %c0_i32, %c0_i32_0 : i32, i32
  }
  func.func @transform_2(%arg0: i32) -> (i32, i32) {
    %c0_i32 = arith.constant 0 : i32
    %c0_i32_0 = arith.constant 0 : i32
    %c0_i32_1 = arith.constant 0 : i32
    return %c0_i32, %c0_i32_0 : i32, i32
  }
  func.func @transform_3(%arg0: i32) -> (i32, i32) {
    %c0_i32 = arith.constant 0 : i32
    %c0_i32_0 = arith.constant 0 : i32
    return %arg0, %c0_i32 : i32, i32
  }
}

</mosaic_0001>

<llo_original>
// kernel: tpu_custom_call.1
$region0: #{tpu_custom_call.1}
  #allocation0 [shape = 'u32[]', space=smem, size = 0x4, offset = 0x4, fixed_abs, tag = 'smem constant byte address 0x4 - core index']
  #allocation1 [shape = 'u32[72,128]{1,0:T(1,128)}', space=vmem, size = 0x9000, scoped, tag = 'internal scratch']
  %s0 = inlined_call_operand.hbm [shape: f32[2,1024], index: 0, kind: input, shape index: {}]
  %s1 = inlined_call_operand.hbm [shape: f32[1024,128], index: 1, kind: input, shape index: {}]
  %s2 = inlined_call_operand.vmem [shape: f32[1,128], index: 2, kind: input, shape index: {}]
  %s3 = inlined_call_operand.hbm [shape: f32[2,128], index: 3, kind: output, shape index: {}]
  %s4 = sld [smem:[#allocation0]]
  $region30: #{tpu_custom_call.1} parent=0
    _
  %s6 = ssub.s32 1, %s4
  %s7 = scalar_select 0, %s6, %s4
  $region1: #{tpu_custom_call.1} parent=0
    #allocation2 [shape = 'u8[32768]{0}', space=vmem, size = 0x8000, scoped, tag = 'input window, operand 0, single buffered']
    #allocation3 [shape = 's32[1]{0}', space=sflag, size = 0x4, scoped, tag = 'scoped memory for tpu_custom_call.1']
    #allocation4 [shape = 's32[1]{0}', space=sflag, size = 0x4, scoped, tag = 'scoped memory for tpu_custom_call.1']
    #allocation5 [shape = 'u8[524288]{0}', space=vmem, size = 0x80000, scoped, tag = 'input window, operand 1, single buffered']
    #allocation6 [shape = 's32[1]{0}', space=sflag, size = 0x4, scoped, tag = 'scoped memory for tpu_custom_call.1']
    #allocation7 [shape = 'u8[4096]{0}', space=vmem, size = 0x1000, scoped, tag = 'output window, operand 0, single buffered']
    %8 = vsyncpa [#allocation3], 0
    %9 = vsyncpa [#allocation6], 0
    %10 = vsyncpa [#allocation4], 0
    // Predicated region
    $region2: #{tpu_custom_call.1} parent=1 // pred_check
      _
    $region3: #{tpu_custom_call.1} parent=1 // pred_check_branch
      %12 = sbr.rel (0) target = $region5
    $region4: #{tpu_custom_call.1} parent=1 // pred_region
      %14 = vsyncadd [#allocation3], 768
      %s15 = sshll.u32 %s0, 4
      %s16 = int_to_ptr.hbm [resolvable:$true] %s15
      %s17 = sshll.u32 [#allocation2], 4
      %s18 = int_to_ptr.vmem [resolvable:$true] %s17
      %23 = dma.hbm_to_vmem [thread:$0]  %s16, 256, %s18, [#allocation3], 256, 256, 16
    $region5: #{tpu_custom_call.1} parent=1 // pred_fallthru
      _
    // Predicated region
    $region6: #{tpu_custom_call.1} parent=1 // pred_check
      _
    $region7: #{tpu_custom_call.1} parent=1 // pred_check_branch
      %25 = sbr.rel (0) target = $region9
    $region8: #{tpu_custom_call.1} parent=1 // pred_region
      %27 = vsyncadd [#allocation6], 0
      %s28 = sshll.u32 %s1, 4
      %s29 = int_to_ptr.hbm [resolvable:$true] %s28
      %s30 = sshll.u32 [#allocation5], 4
      %s31 = int_to_ptr.vmem [resolvable:$true] %s30
      %36 = dma.hbm_to_vmem [thread:$0]  %s29, 16384, %s31, [#allocation6], 128, 128, 8
    $region9: #{tpu_custom_call.1} parent=1 // pred_fallthru
      _
    // Predicated region
    $region10: #{tpu_custom_call.1} parent=1 // pred_check
      _
    $region11: #{tpu_custom_call.1} parent=1 // pred_check_branch
      %38 = sbr.rel (0) target = $region13
    $region12: #{tpu_custom_call.1} parent=1 // pred_region
      _
    $region13: #{tpu_custom_call.1} parent=1 // pred_fallthru
      _
    // Predicated region
    $region14: #{tpu_custom_call.1} parent=1 // pred_check
      _
    $region15: #{tpu_custom_call.1} parent=1 // pred_check_branch
      %40 = sbr.rel (0) target = $region17
    $region16: #{tpu_custom_call.1} parent=1 // pred_region
      %42 = dma.done [#allocation3], 1024
    $region17: #{tpu_custom_call.1} parent=1 // pred_fallthru
      _
    // Predicated region
    $region18: #{tpu_custom_call.1} parent=1 // pred_check
      _
    $region19: #{tpu_custom_call.1} parent=1 // pred_check_branch
      %44 = sbr.rel (0) target = $region21
    $region20: #{tpu_custom_call.1} parent=1 // pred_region
      %46 = dma.done [#allocation6], 16384
    $region21: #{tpu_custom_call.1} parent=1 // pred_fallthru
      _
    %v47 = vld [vmem:[#allocation2] sm:$0xff]
    %v48 = vld [vmem:[#allocation2 + $0x8] sm:$0xff]
    %v49 = vld [vmem:[#allocation2 + $0x10] sm:$0xff]
    %v50 = vld [vmem:[#allocation2 + $0x18] sm:$0xff]
    %v51 = vld [vmem:[#allocation2 + $0x20] sm:$0xff]
    %v52 = vld [vmem:[#allocation2 + $0x28] sm:$0xff]
    %v53 = vld [vmem:[#allocation2 + $0x30] sm:$0xff]
    %v54 = vld [vmem:[#allocation2 + $0x38] sm:$0xff]
    %v55 = vld [vmem:[#allocation5] sm:$0xff]
    %v56 = vld [vmem:[#allocation5 + $0x8] sm:$0xff]
    %v57 = vld [vmem:[#allocation5 + $0x10] sm:$0xff]
    %v58 = vld [vmem:[#allocation5 + $0x18] sm:$0xff]
    %v59 = vld [vmem:[#allocation5 + $0x20] sm:$0xff]
    %v60 = vld [vmem:[#allocation5 + $0x28] sm:$0xff]
    %v61 = vld [vmem:[#allocation5 + $0x30] sm:$0xff]
    %v62 = vld [vmem:[#allocation5 + $0x38] sm:$0xff]
    %v63 = vld [vmem:[#allocation5 + $0x40] sm:$0xff]
    %v64 = vld [vmem:[#allocation5 + $0x48] sm:$0xff]
    %v65 = vld [vmem:[#allocation5 + $0x50] sm:$0xff]
    %v66 = vld [vmem:[#allocation5 + $0x58] sm:$0xff]
    %v67 = vld [vmem:[#allocation5 + $0x60] sm:$0xff]
    %v68 = vld [vmem:[#allocation5 + $0x68] sm:$0xff]
    %v69 = vld [vmem:[#allocation5 + $0x70] sm:$0xff]
    %v70 = vld [vmem:[#allocation5 + $0x78] sm:$0xff]
    %v71 = vld [vmem:[#allocation5 + $0x80] sm:$0xff]
    %v72 = vld [vmem:[#allocation5 + $0x88] sm:$0xff]
    %v73 = vld [vmem:[#allocation5 + $0x90] sm:$0xff]
    %v74 = vld [vmem:[#allocation5 + $0x98] sm:$0xff]
    %v75 = vld [vmem:[#allocation5 + $0xa0] sm:$0xff]
    %v76 = vld [vmem:[#allocation5 + $0xa8] sm:$0xff]
    %v77 = vld [vmem:[#allocation5 + $0xb0] sm:$0xff]
    %v78 = vld [vmem:[#allocation5 + $0xb8] sm:$0xff]
    %v79 = vld [vmem:[#allocation5 + $0xc0] sm:$0xff]
    %v80 = vld [vmem:[#allocation5 + $0xc8] sm:$0xff]
    %v81 = vld [vmem:[#allocation5 + $0xd0] sm:$0xff]
    %v82 = vld [vmem:[#allocation5 + $0xd8] sm:$0xff]
    %v83 = vld [vmem:[#allocation5 + $0xe0] sm:$0xff]
    %v84 = vld [vmem:[#allocation5 + $0xe8] sm:$0xff]
    %v85 = vld [vmem:[#allocation5 + $0xf0] sm:$0xff]
    %v86 = vld [vmem:[#allocation5 + $0xf8] sm:$0xff]
    %v87 = vld [vmem:[#allocation5 + $0x100] sm:$0xff]
    %v88 = vld [vmem:[#allocation5 + $0x108] sm:$0xff]
    %v89 = vld [vmem:[#allocation5 + $0x110] sm:$0xff]
    %v90 = vld [vmem:[#allocation5 + $0x118] sm:$0xff]
    %v91 = vld [vmem:[#allocation5 + $0x120] sm:$0xff]
    %v92 = vld [vmem:[#allocation5 + $0x128] sm:$0xff]
    %v93 = vld [vmem:[#allocation5 + $0x130] sm:$0xff]
    %v94 = vld [vmem:[#allocation5 + $0x138] sm:$0xff]
    %v95 = vld [vmem:[#allocation5 + $0x140] sm:$0xff]
    %v96 = vld [vmem:[#allocation5 + $0x148] sm:$0xff]
    %v97 = vld [vmem:[#allocation5 + $0x150] sm:$0xff]
    %v98 = vld [vmem:[#allocation5 + $0x158] sm:$0xff]
    %v99 = vld [vmem:[#allocation5 + $0x160] sm:$0xff]
    %v100 = vld [vmem:[#allocation5 + $0x168] sm:$0xff]
    %v101 = vld [vmem:[#allocation5 + $0x170] sm:$0xff]
    %v102 = vld [vmem:[#allocation5 + $0x178] sm:$0xff]
    %v103 = vld [vmem:[#allocation5 + $0x180] sm:$0xff]
    %v104 = vld [vmem:[#allocation5 + $0x188] sm:$0xff]
    %v105 = vld [vmem:[#allocation5 + $0x190] sm:$0xff]
    %v106 = vld [vmem:[#allocation5 + $0x198] sm:$0xff]
    %v107 = vld [vmem:[#allocation5 + $0x1a0] sm:$0xff]
    %v108 = vld [vmem:[#allocation5 + $0x1a8] sm:$0xff]
    %v109 = vld [vmem:[#allocation5 + $0x1b0] sm:$0xff]
    %v110 = vld [vmem:[#allocation5 + $0x1b8] sm:$0xff]
    %v111 = vld [vmem:[#allocation5 + $0x1c0] sm:$0xff]
    %v112 = vld [vmem:[#allocation5 + $0x1c8] sm:$0xff]
    %v113 = vld [vmem:[#allocation5 + $0x1d0] sm:$0xff]
    %v114 = vld [vmem:[#allocation5 + $0x1d8] sm:$0xff]
    %v115 = vld [vmem:[#allocation5 + $0x1e0] sm:$0xff]
    %v116 = vld [vmem:[#allocation5 + $0x1e8] sm:$0xff]
    %v117 = vld [vmem:[#allocation5 + $0x1f0] sm:$0xff]
    %v118 = vld [vmem:[#allocation5 + $0x1f8] sm:$0xff]
    %v119 = vld [vmem:[#allocation5 + $0x200] sm:$0xff]
    %v120 = vld [vmem:[#allocation5 + $0x208] sm:$0xff]
    %v121 = vld [vmem:[#allocation5 + $0x210] sm:$0xff]
    %v122 = vld [vmem:[#allocation5 + $0x218] sm:$0xff]
    %v123 = vld [vmem:[#allocation5 + $0x220] sm:$0xff]
    %v124 = vld [vmem:[#allocation5 + $0x228] sm:$0xff]
    %v125 = vld [vmem:[#allocation5 + $0x230] sm:$0xff]
    %v126 = vld [vmem:[#allocation5 + $0x238] sm:$0xff]
    %v127 = vld [vmem:[#allocation5 + $0x240] sm:$0xff]
    %v128 = vld [vmem:[#allocation5 + $0x248] sm:$0xff]
    %v129 = vld [vmem:[#allocation5 + $0x250] sm:$0xff]
    %v130 = vld [vmem:[#allocation5 + $0x258] sm:$0xff]
    %v131 = vld [vmem:[#allocation5 + $0x260] sm:$0xff]
    %v132 = vld [vmem:[#allocation5 + $0x268] sm:$0xff]
    %v133 = vld [vmem:[#allocation5 + $0x270] sm:$0xff]
    %v134 = vld [vmem:[#allocation5 + $0x278] sm:$0xff]
    %v135 = vld [vmem:[#allocation5 + $0x280] sm:$0xff]
    %v136 = vld [vmem:[#allocation5 + $0x288] sm:$0xff]
    %v137 = vld [vmem:[#allocation5 + $0x290] sm:$0xff]
    %v138 = vld [vmem:[#allocation5 + $0x298] sm:$0xff]
    %v139 = vld [vmem:[#allocation5 + $0x2a0] sm:$0xff]
    %v140 = vld [vmem:[#allocation5 + $0x2a8] sm:$0xff]
    %v141 = vld [vmem:[#allocation5 + $0x2b0] sm:$0xff]
    %v142 = vld [vmem:[#allocation5 + $0x2b8] sm:$0xff]
    %v143 = vld [vmem:[#allocation5 + $0x2c0] sm:$0xff]
    %v144 = vld [vmem:[#allocation5 + $0x2c8] sm:$0xff]
    %v145 = vld [vmem:[#allocation5 + $0x2d0] sm:$0xff]
    %v146 = vld [vmem:[#allocation5 + $0x2d8] sm:$0xff]
    %v147 = vld [vmem:[#allocation5 + $0x2e0] sm:$0xff]
    %v148 = vld [vmem:[#allocation5 + $0x2e8] sm:$0xff]
    %v149 = vld [vmem:[#allocation5 + $0x2f0] sm:$0xff]
    %v150 = vld [vmem:[#allocation5 + $0x2f8] sm:$0xff]
    %v151 = vld [vmem:[#allocation5 + $0x300] sm:$0xff]
    %v152 = vld [vmem:[#allocation5 + $0x308] sm:$0xff]
    %v153 = vld [vmem:[#allocation5 + $0x310] sm:$0xff]
    %v154 = vld [vmem:[#allocation5 + $0x318] sm:$0xff]
    %v155 = vld [vmem:[#allocation5 + $0x320] sm:$0xff]
    %v156 = vld [vmem:[#allocation5 + $0x328] sm:$0xff]
    %v157 = vld [vmem:[#allocation5 + $0x330] sm:$0xff]
    %v158 = vld [vmem:[#allocation5 + $0x338] sm:$0xff]
    %v159 = vld [vmem:[#allocation5 + $0x340] sm:$0xff]
    %v160 = vld [vmem:[#allocation5 + $0x348] sm:$0xff]
    %v161 = vld [vmem:[#allocation5 + $0x350] sm:$0xff]
    %v162 = vld [vmem:[#allocation5 + $0x358] sm:$0xff]
    %v163 = vld [vmem:[#allocation5 + $0x360] sm:$0xff]
    %v164 = vld [vmem:[#allocation5 + $0x368] sm:$0xff]
    %v165 = vld [vmem:[#allocation5 + $0x370] sm:$0xff]
    %v166 = vld [vmem:[#allocation5 + $0x378] sm:$0xff]
    %v167 = vld [vmem:[#allocation5 + $0x380] sm:$0xff]
    %v168 = vld [vmem:[#allocation5 + $0x388] sm:$0xff]
    %v169 = vld [vmem:[#allocation5 + $0x390] sm:$0xff]
    %v170 = vld [vmem:[#allocation5 + $0x398] sm:$0xff]
    %v171 = vld [vmem:[#allocation5 + $0x3a0] sm:$0xff]
    %v172 = vld [vmem:[#allocation5 + $0x3a8] sm:$0xff]
    %v173 = vld [vmem:[#allocation5 + $0x3b0] sm:$0xff]
    %v174 = vld [vmem:[#allocation5 + $0x3b8] sm:$0xff]
    %v175 = vld [vmem:[#allocation5 + $0x3c0] sm:$0xff]
    %v176 = vld [vmem:[#allocation5 + $0x3c8] sm:$0xff]
    %v177 = vld [vmem:[#allocation5 + $0x3d0] sm:$0xff]
    %v178 = vld [vmem:[#allocation5 + $0x3d8] sm:$0xff]
    %v179 = vld [vmem:[#allocation5 + $0x3e0] sm:$0xff]
    %v180 = vld [vmem:[#allocation5 + $0x3e8] sm:$0xff]
    %v181 = vld [vmem:[#allocation5 + $0x3f0] sm:$0xff]
    %v182 = vld [vmem:[#allocation5 + $0x3f8] sm:$0xff]
    %v183 = vld [vmem:[%s2] sm:$0x1]
    %v185 = vperm.slane %v183, 0
    %195 = vst [vmem:[#allocation1] ss:$4 sm:$0xff] %v47
    %s196 = scalar_lea.vmem [#allocation1], 1
    %197 = vst [vmem:[%s196] ss:$4 sm:$0xff] %v49
    %s198 = scalar_lea.vmem [#allocation1], 2
    %199 = vst [vmem:[%s198] ss:$4 sm:$0xff] %v51
    %s200 = scalar_lea.vmem [#allocation1], 3
    %201 = vst [vmem:[%s200] ss:$4 sm:$0xff] %v53
    %s202 = scalar_lea.vmem [#allocation1], 32
    %203 = vst [vmem:[%s202] ss:$4 sm:$0xff] %v48
    %s204 = scalar_lea.vmem [#allocation1], 33
    %205 = vst [vmem:[%s204] ss:$4 sm:$0xff] %v50
    %s206 = scalar_lea.vmem [#allocation1], 34
    %207 = vst [vmem:[%s206] ss:$4 sm:$0xff] %v52
    %s208 = scalar_lea.vmem [#allocation1], 35
    %209 = vst [vmem:[%s208] ss:$4 sm:$0xff] %v54
    %v210 = vld.sshfl [vmem:[#allocation1] sm:$0xff pattern:$0x73625140]
    %v211 = vld.sshfl [vmem:[#allocation1 + $0x8] sm:$0xff pattern:$0x73625140]
    %v212 = vld.sshfl [vmem:[#allocation1 + $0x10] sm:$0xff pattern:$0x73625140]
    %v213 = vld.sshfl [vmem:[#allocation1 + $0x18] sm:$0xff pattern:$0x73625140]
    %v214 = vld.sshfl [vmem:[#allocation1 + $0x20] sm:$0xff pattern:$0x73625140]
    %v215 = vld.sshfl [vmem:[#allocation1 + $0x28] sm:$0xff pattern:$0x73625140]
    %v216 = vld.sshfl [vmem:[#allocation1 + $0x30] sm:$0xff pattern:$0x73625140]
    %v217 = vld.sshfl [vmem:[#allocation1 + $0x38] sm:$0xff pattern:$0x73625140]
    %226 = vmatpush.msra.mxu0 %v70
    %227 = vmatpush.msra.mxu0 %v69
    %228 = vmatpush.msra.mxu0 %v68
    %229 = vmatpush.msra.mxu0 %v67
    %230 = vmatpush.msra.mxu0 %v66
    %231 = vmatpush.msra.mxu0 %v65
    %232 = vmatpush.msra.mxu0 %v64
    %233 = vmatpush.msra.mxu0 %v63
    %234 = vmatpush.msra.mxu0 %v62
    %235 = vmatpush.msra.mxu0 %v61
    %236 = vmatpush.msra.mxu0 %v60
    %237 = vmatpush.msra.mxu0 %v59
    %238 = vmatpush.msra.mxu0 %v58
    %239 = vmatpush.msra.mxu0 %v57
    %240 = vmatpush.msra.mxu0 %v56
    %241 = vmatpush.msra.mxu0 %v55
    %242 = vmatmul.f32.gmra.mxu0 %v210
    %v243 = vpop.f32.mrf.mxu0
    %v244 = vadd.f32 %v185, %v243
    %245 = vdwg.mxu0
    %246 = vmatpush.msra.mxu0 %v86
    %247 = vmatpush.msra.mxu0 %v85
    %248 = vmatpush.msra.mxu0 %v84
    %249 = vmatpush.msra.mxu0 %v83
    %250 = vmatpush.msra.mxu0 %v82
    %251 = vmatpush.msra.mxu0 %v81
    %252 = vmatpush.msra.mxu0 %v80
    %253 = vmatpush.msra.mxu0 %v79
    %254 = vmatpush.msra.mxu0 %v78
    %255 = vmatpush.msra.mxu0 %v77
    %256 = vmatpush.msra.mxu0 %v76
    %257 = vmatpush.msra.mxu0 %v75
    %258 = vmatpush.msra.mxu0 %v74
    %259 = vmatpush.msra.mxu0 %v73
    %260 = vmatpush.msra.mxu0 %v72
    %261 = vmatpush.msra.mxu0 %v71
    %262 = vmatmul.f32.gmra.mxu0 %v211
    %v263 = vpop.f32.mrf.mxu0
    %v264 = vadd.f32 %v244, %v263
    %265 = vdwg.mxu0
    %266 = vmatpush.msra.mxu0 %v102
    %267 = vmatpush.msra.mxu0 %v101
    %268 = vmatpush.msra.mxu0 %v100
    %269 = vmatpush.msra.mxu0 %v99
    %270 = vmatpush.msra.mxu0 %v98
    %271 = vmatpush.msra.mxu0 %v97
    %272 = vmatpush.msra.mxu0 %v96
    %273 = vmatpush.msra.mxu0 %v95
    %274 = vmatpush.msra.mxu0 %v94
    %275 = vmatpush.msra.mxu0 %v93
    %276 = vmatpush.msra.mxu0 %v92
    %277 = vmatpush.msra.mxu0 %v91
    %278 = vmatpush.msra.mxu0 %v90
    %279 = vmatpush.msra.mxu0 %v89
    %280 = vmatpush.msra.mxu0 %v88
    %281 = vmatpush.msra.mxu0 %v87
    %282 = vmatmul.f32.gmra.mxu0 %v212
    %v283 = vpop.f32.mrf.mxu0
    %v284 = vadd.f32 %v264, %v283
    %285 = vdwg.mxu0
    %286 = vmatpush.msra.mxu0 %v118
    %287 = vmatpush.msra.mxu0 %v117
    %288 = vmatpush.msra.mxu0 %v116
    %289 = vmatpush.msra.mxu0 %v115
    %290 = vmatpush.msra.mxu0 %v114
    %291 = vmatpush.msra.mxu0 %v113
    %292 = vmatpush.msra.mxu0 %v112
    %293 = vmatpush.msra.mxu0 %v111
    %294 = vmatpush.msra.mxu0 %v110
    %295 = vmatpush.msra.mxu0 %v109
    %296 = vmatpush.msra.mxu0 %v108
    %297 = vmatpush.msra.mxu0 %v107
    %298 = vmatpush.msra.mxu0 %v106
    %299 = vmatpush.msra.mxu0 %v105
    %300 = vmatpush.msra.mxu0 %v104
    %301 = vmatpush.msra.mxu0 %v103
    %302 = vmatmul.f32.gmra.mxu0 %v213
    %v303 = vpop.f32.mrf.mxu0
    %v304 = vadd.f32 %v284, %v303
    %305 = vdwg.mxu0
    %306 = vmatpush.msra.mxu0 %v134
    %307 = vmatpush.msra.mxu0 %v133
    %308 = vmatpush.msra.mxu0 %v132
    %309 = vmatpush.msra.mxu0 %v131
    %310 = vmatpush.msra.mxu0 %v130
    %311 = vmatpush.msra.mxu0 %v129
    %312 = vmatpush.msra.mxu0 %v128
    %313 = vmatpush.msra.mxu0 %v127
    %314 = vmatpush.msra.mxu0 %v126
    %315 = vmatpush.msra.mxu0 %v125
    %316 = vmatpush.msra.mxu0 %v124
    %317 = vmatpush.msra.mxu0 %v123
    %318 = vmatpush.msra.mxu0 %v122
    %319 = vmatpush.msra.mxu0 %v121
    %320 = vmatpush.msra.mxu0 %v120
    %321 = vmatpush.msra.mxu0 %v119
    %322 = vmatmul.f32.gmra.mxu0 %v214
    %v323 = vpop.f32.mrf.mxu0
    %v324 = vadd.f32 %v304, %v323
    %325 = vdwg.mxu0
    %326 = vmatpush.msra.mxu0 %v150
    %327 = vmatpush.msra.mxu0 %v149
    %328 = vmatpush.msra.mxu0 %v148
    %329 = vmatpush.msra.mxu0 %v147
    %330 = vmatpush.msra.mxu0 %v146
    %331 = vmatpush.msra.mxu0 %v145
    %332 = vmatpush.msra.mxu0 %v144
    %333 = vmatpush.msra.mxu0 %v143
    %334 = vmatpush.msra.mxu0 %v142
    %335 = vmatpush.msra.mxu0 %v141
    %336 = vmatpush.msra.mxu0 %v140
    %337 = vmatpush.msra.mxu0 %v139
    %338 = vmatpush.msra.mxu0 %v138
    %339 = vmatpush.msra.mxu0 %v137
    %340 = vmatpush.msra.mxu0 %v136
    %341 = vmatpush.msra.mxu0 %v135
    %342 = vmatmul.f32.gmra.mxu0 %v215
    %v343 = vpop.f32.mrf.mxu0
    %v344 = vadd.f32 %v324, %v343
    %345 = vdwg.mxu0
    %346 = vmatpush.msra.mxu0 %v166
    %347 = vmatpush.msra.mxu0 %v165
    %348 = vmatpush.msra.mxu0 %v164
    %349 = vmatpush.msra.mxu0 %v163
    %350 = vmatpush.msra.mxu0 %v162
    %351 = vmatpush.msra.mxu0 %v161
    %352 = vmatpush.msra.mxu0 %v160
    %353 = vmatpush.msra.mxu0 %v159
    %354 = vmatpush.msra.mxu0 %v158
    %355 = vmatpush.msra.mxu0 %v157
    %356 = vmatpush.msra.mxu0 %v156
    %357 = vmatpush.msra.mxu0 %v155
    %358 = vmatpush.msra.mxu0 %v154
    %359 = vmatpush.msra.mxu0 %v153
    %360 = vmatpush.msra.mxu0 %v152
    %361 = vmatpush.msra.mxu0 %v151
    %362 = vmatmul.f32.gmra.mxu0 %v216
    %v363 = vpop.f32.mrf.mxu0
    %v364 = vadd.f32 %v344, %v363
    %365 = vdwg.mxu0
    %366 = vmatpush.msra.mxu0 %v182
    %367 = vmatpush.msra.mxu0 %v181
    %368 = vmatpush.msra.mxu0 %v180
    %369 = vmatpush.msra.mxu0 %v179
    %370 = vmatpush.msra.mxu0 %v178
    %371 = vmatpush.msra.mxu0 %v177
    %372 = vmatpush.msra.mxu0 %v176
    %373 = vmatpush.msra.mxu0 %v175
    %374 = vmatpush.msra.mxu0 %v174
    %375 = vmatpush.msra.mxu0 %v173
    %376 = vmatpush.msra.mxu0 %v172
    %377 = vmatpush.msra.mxu0 %v171
    %378 = vmatpush.msra.mxu0 %v170
    %379 = vmatpush.msra.mxu0 %v169
    %380 = vmatpush.msra.mxu0 %v168
    %381 = vmatpush.msra.mxu0 %v167
    %382 = vmatmul.f32.gmra.mxu0 %v217
    %v383 = vpop.f32.mrf.mxu0
    %v384 = vadd.f32 %v364, %v383
    %385 = vdwg.mxu0
    %386 = vst [vmem:[#allocation7] sm:$0xff] %v384
    // Predicated region
    $region22: #{tpu_custom_call.1} parent=1 // pred_check
      _
    $region23: #{tpu_custom_call.1} parent=1 // pred_check_branch
      %388 = sbr.rel (0) target = $region25
    $region24: #{tpu_custom_call.1} parent=1 // pred_region
      %390 = vsyncadd [#allocation4], 96
      %s391 = sshll.u32 [#allocation7], 4
      %s392 = int_to_ptr.vmem [resolvable:$true] %s391
      %s393 = sshll.u32 %s3, 4
      %s394 = int_to_ptr.hbm [resolvable:$true] %s393
      %399 = dma.vmem_to_hbm [thread:$0]  %s392, 32, %s394, [#allocation4], 32, 32, 2
    $region25: #{tpu_custom_call.1} parent=1 // pred_fallthru
      _
    // Predicated region
    $region26: #{tpu_custom_call.1} parent=1 // pred_check
      _
    $region27: #{tpu_custom_call.1} parent=1 // pred_check_branch
      %401 = sbr.rel (0) target = $region29
    $region28: #{tpu_custom_call.1} parent=1 // pred_region
      %403 = dma.done [#allocation4], 128
    $region29: #{tpu_custom_call.1} parent=1 // pred_fallthru
      _
    %404 = vsyncpa [#allocation3], 1
    %405 = vsyncpa [#allocation6], 1
    %406 = vsyncpa [#allocation4], 1

</llo_original>
